<compile_context>
chip_gen: v5e
topology: v5e:2x2
jax: 0.10.0
libtpu: 0.0.40
codegen_flags: <defaults>
</compile_context>

<pallas_src>
import functools

import jax
import jax.numpy as jnp
from jax import lax
from jax.experimental import pallas as pl
from jax.experimental.pallas import tpu as pltpu


def _banded_weights(w, width):
    """(3, 3, Cin, Cout) conv kernel -> (3, W*Cin, W*Cout) banded matrices.

    T[dy, q*Cin + ci, j*Cout + co] = w[dy, q - j + 1, ci, co] for |q - j| <= 1
    and 0 otherwise: one block-tridiagonal matrix per kernel row.  The
    W-direction padding=1 is baked into the band edges, so a whole image row
    with channels folded into lanes is convolved along W by one MXU matmul.
    """
    _, _, cin, cout = w.shape
    q = jnp.arange(width)[:, None]          # input column
    j = jnp.arange(width)[None, :]          # output column
    dx = q - j + 1                          # tap index along the kernel W axis
    valid = (dx >= 0) & (dx <= 2)
    t = w[:, jnp.clip(dx, 0, 2)]            # (3, W, W, Cin, Cout)
    t = jnp.where(valid[None, :, :, None, None], t, 0.0)
    t = jnp.transpose(t, (0, 1, 3, 2, 4))   # (3, W, Cin, W, Cout)
    return t.reshape(3, width * cin, width * cout)


def _basic_block_kernel(x_ref, t1_ref, t2_ref, b1_ref, b2_ref, out_ref, *,
                        img_rows, compute_dtype):
    """One grid step = block_n whole images, rows flattened to (M, W*C).

    x_ref  : (M, W*C)      unpadded input rows, channels folded into lanes
    t*_ref : (3, W*C, W*C) banded conv weights with BN scale folded in
    b*_ref : (1, W*C)      BN shift, tiled across W
    out_ref: (M, W*C)
    """
    m, _ = x_ref.shape
    x = x_ref[...]                                           # (M, W*C) f32

    # Image-boundary masks: dy=0/dy=2 taps must not bleed across images.
    # Rows 0 and M-1 (the roll wrap rows) are covered by these masks too.
    row = lax.broadcasted_iota(jnp.int32, (m, 1), 0)
    not_first = (row % img_rows) != 0                  # valid rows, dy=0 tap
    not_last = (row % img_rows) != (img_rows - 1)      # valid rows, dy=2 tap

    def conv3x3(v, t_ref):
        # Realign the shifted taps on the *value* (XLU sublane rotate + mask)
        # instead of slicing refs at sublane offset 1 -> three identical,
        # aligned MXU operands and pure register/MRB accumulation.
        v_up = jnp.where(not_first, pltpu.roll(v, shift=1, axis=0), 0.0)
        v_dn = jnp.where(not_last, pltpu.roll(v, shift=m - 1, axis=0), 0.0)
        acc = jnp.dot(v.astype(compute_dtype), t_ref[1],
                      preferred_element_type=jnp.float32)
        acc = acc + jnp.dot(v_up.astype(compute_dtype), t_ref[0],
                            preferred_element_type=jnp.float32)
        acc = acc + jnp.dot(v_dn.astype(compute_dtype), t_ref[2],
                            preferred_element_type=jnp.float32)
        return acc

    # conv1 -> BN1 (scale folded into t1, shift added here) -> ReLU
    y = jnp.maximum(conv3x3(x, t1_ref) + b1_ref[...], 0.0)
    # TODO(synk): for large H/W tiles, stage y in a bf16 VMEM scratch instead
    # of holding the whole tile in registers between the two convs.

    # conv2 -> BN2 (no activation)
    z = conv3x3(y, t2_ref) + b2_ref[...]

    # identity residual straight from the already-loaded x block.
    # TODO(synk): apply the downsample module here for PSMNet's stride>1 blocks.
    out_ref[...] = (z + x).astype(out_ref.dtype)


def basic_block_pallas(x_nhwc, w1, w2, bn1, bn2, eps=1e-5,
                       compute_dtype=jnp.bfloat16, block_n=None):
    """x_nhwc: (N, H, W, C) f32; w*: (3,3,C,C) HWIO; bn*: (gamma, beta, mean, var)."""
    N, H, W, Cin = x_nhwc.shape
    Cout = w1.shape[-1]
    assert Cin == Cout, "identity residual requires in_planes == out_planes"

    if block_n is None:
        # Largest divisor of N that keeps the matmul M dim (block_n*H) <= 256.
        block_n = 1
        for cand in range(N, 0, -1):
            if N % cand == 0 and cand * H <= 256:
                block_n = cand
                break
    assert N % block_n == 0
    block_rows = block_n * H
    assert block_rows % 8 == 0 or block_rows == N * H, (
        "block rows must satisfy the (8, 128) sublane constraint")

    def fold(bn):
        gamma, beta, mean, var = bn
        scale = gamma * lax.rsqrt(var + eps)
        shift = beta - mean * scale
        return scale, shift

    s1, b1 = fold(bn1)
    s2, b2 = fold(bn2)

    # Fold BN scale into the conv weights (f32), build the banded matrices
    # once at trace time, then cast operands to the MXU compute dtype.
    t1 = _banded_weights(w1 * s1, W).astype(compute_dtype)
    t2 = _banded_weights(w2 * s2, W).astype(compute_dtype)

    # Tile the shifts across W so they broadcast against channel-folded rows.
    b1t = jnp.tile(b1, W).reshape(1, W * Cout).astype(jnp.float32)
    b2t = jnp.tile(b2, W).reshape(1, W * Cout).astype(jnp.float32)

    # Lane-dense activation layout: (N, H, W, C) -> (N*H, W*C).
    x_flat = x_nhwc.reshape(N * H, W * Cin)

    wbytes = jnp.dtype(compute_dtype).itemsize
    cost = pl.CostEstimate(
        flops=2 * 2 * 3 * N * H * (W * Cin) * (W * Cout),
        transcendentals=0,
        bytes_accessed=(N * H * W * Cin * 4            # x (f32 in)
                        + N * H * W * Cout * 4         # out (f32 out)
                        + 2 * 3 * (W * Cin) * (W * Cout) * wbytes  # weights
                        + 2 * W * Cout * 4),           # BN shifts
    )

    kernel = functools.partial(_basic_block_kernel, img_rows=H,
                               compute_dtype=compute_dtype)

    # TODO(synk): for real PSMNet resolutions (H, W >= 128, C = 32) tile W into
    # Wt*C ~ 256-lane bands with a 1-column halo baked into per-tile banded
    # weights, tile H with a 1-row halo (grid=(N, H//Ht), both parallel), mark
    # the then-larger weight BlockSpecs pipeline_mode=pl.Buffered(1), and set
    # vmem_limit_bytes to the double-buffered band + weight footprint.
    out = pl.pallas_call(
        kernel,
        out_shape=jax.ShapeDtypeStruct((N * H, W * Cout), x_nhwc.dtype),
        grid_spec=pltpu.PrefetchScalarGridSpec(
            num_scalar_prefetch=0,
            grid=(N // block_n,),
            in_specs=[
                pl.BlockSpec((block_rows, W * Cin), lambda n: (n, 0)),
                pl.BlockSpec((3, W * Cin, W * Cout), lambda n: (0, 0, 0)),
                pl.BlockSpec((3, W * Cout, W * Cout), lambda n: (0, 0, 0)),
                pl.BlockSpec((1, W * Cout), lambda n: (0, 0)),
                pl.BlockSpec((1, W * Cout), lambda n: (0, 0)),
            ],
            out_specs=pl.BlockSpec((block_rows, W * Cout), lambda n: (n, 0)),
        ),
        compiler_params=pltpu.CompilerParams(
            dimension_semantics=("parallel",)),
        cost_estimate=cost,
    )(x_flat, t1, t2, b1t, b2t)
    return out.reshape(N, H, W, Cout)


def basic_block_reference(x_nhwc, w1, w2, bn1, bn2, eps=1e-5):
    """Pure-JAX reference (conv_general_dilated) for correctness check."""
    dn = lax.conv_dimension_numbers(x_nhwc.shape, w1.shape,
                                    ("NHWC", "HWIO", "NHWC"))

    def conv(x, w):
        return lax.conv_general_dilated(x, w, window_strides=(1, 1),
                                        padding=((1, 1), (1, 1)),
                                        dimension_numbers=dn)

    def bn(y, p):
        gamma, beta, mean, var = p
        return (y - mean) * gamma * lax.rsqrt(var + eps) + beta

    out = jax.nn.relu(bn(conv(x_nhwc, w1), bn1))
    out = bn(conv(out, w2), bn2)
    return out + x_nhwc


if __name__ == "__main__":
    key = jax.random.PRNGKey(0)
    N, C, Hs, Ws = 4, 8, 16, 16  # in_planes == out_planes, stride=1, pad=1

    ks = jax.random.split(key, 11)
    # Input in PyTorch NCHW, transposed to NHWC for the kernel.
    x_nchw = jax.random.normal(ks[0], (N, C, Hs, Ws), jnp.float32)
    x_nhwc = jnp.transpose(x_nchw, (0, 2, 3, 1))

    # Conv weights (HWIO), no bias (conv is followed by BN).
    w1 = jax.random.normal(ks[1], (3, 3, C, C), jnp.float32) * 0.1
    w2 = jax.random.normal(ks[2], (3, 3, C, C), jnp.float32) * 0.1

    # BatchNorm params (gamma, beta, running_mean, running_var).
    bn1 = (1.0 + 0.1 * jax.random.normal(ks[3], (C,), jnp.float32),
           0.1 * jax.random.normal(ks[4], (C,), jnp.float32),
           0.1 * jax.random.normal(ks[5], (C,), jnp.float32),
           jnp.abs(jax.random.normal(ks[6], (C,), jnp.float32)) + 1.0)
    bn2 = (1.0 + 0.1 * jax.random.normal(ks[7], (C,), jnp.float32),
           0.1 * jax.random.normal(ks[8], (C,), jnp.float32),
           0.1 * jax.random.normal(ks[9], (C,), jnp.float32),
           jnp.abs(jax.random.normal(ks[10], (C,), jnp.float32)) + 1.0)

    ref = basic_block_reference(x_nhwc, w1, w2, bn1, bn2)

    # Default path: bf16 MXU operands (full-rate on v5e/v6e/v7x), f32
    # accumulation / BN / ReLU / residual.  block_n=2 -> 2 images per grid
    # step (M = 32 rows), exercising the image-boundary masking and a
    # multi-step pipelined grid.
    out_bf16 = jax.block_until_ready(
        basic_block_pallas(x_nhwc, w1, w2, bn1, bn2, block_n=2))
    assert out_bf16.shape == ref.shape == (N, Hs, Ws, C)
    assert jnp.allclose(out_bf16, ref, atol=5e-2, rtol=5e-2), (
        float(jnp.max(jnp.abs(out_bf16 - ref))))

    # f32-operand path: tight numerical check of the banded formulation.
    out_f32 = jax.block_until_ready(
        basic_block_pallas(x_nhwc, w1, w2, bn1, bn2,
                           compute_dtype=jnp.float32, block_n=2))
    assert jnp.allclose(out_f32, ref, atol=1e-3, rtol=1e-3), (
        float(jnp.max(jnp.abs(out_f32 - ref))))

    print("KERNEL_OK")
</pallas_src>

<mosaic_0001>
module attributes {stable_mosaic.version = 11 : i64} {
  func.func @_basic_block_kernel(%arg0: i32, %arg1: memref<32x128xf32, #tpu.memory_space<vmem>>, %arg2: memref<3x128x128xbf16, #tpu.memory_space<vmem>>, %arg3: memref<3x128x128xbf16, #tpu.memory_space<vmem>>, %arg4: memref<1x128xf32, #tpu.memory_space<vmem>>, %arg5: memref<1x128xf32, #tpu.memory_space<vmem>>, %arg6: memref<32x128xf32, #tpu.memory_space<vmem>>) attributes {dimension_semantics = [#tpu.dimension_semantics<parallel>], iteration_bounds = array<i64: 2>, scalar_prefetch = 0 : i64, scratch_operands = 0 : i64, tpu.core_type = #tpu.core_type<tc>, window_params = [{transform_indices = @transform_0, window_bounds = array<i64: 32, 128>}, {pipeline_mode = #tpu.pipeline_mode<synchronous>, transform_indices = @transform_1, window_bounds = array<i64: 3, 128, 128>}, {pipeline_mode = #tpu.pipeline_mode<synchronous>, transform_indices = @transform_2, window_bounds = array<i64: 3, 128, 128>}, {pipeline_mode = #tpu.pipeline_mode<synchronous>, transform_indices = @transform_3, window_bounds = array<i64: 1, 128>}, {pipeline_mode = #tpu.pipeline_mode<synchronous>, transform_indices = @transform_4, window_bounds = array<i64: 1, 128>}, {transform_indices = @transform_5, window_bounds = array<i64: 32, 128>}]} {
    %c0 = arith.constant 0 : index
    %c0_0 = arith.constant 0 : index
    %0 = vector.load %arg1[%c0, %c0_0] : memref<32x128xf32, #tpu.memory_space<vmem>>, vector<32x128xf32>
    %1 = tpu.iota {dimensions = array<i32: 0>} : vector<32x1xi32>
    %c16_i32 = arith.constant 16 : i32
    %c0_i32 = arith.constant 0 : i32
    %2 = arith.cmpi eq, %c16_i32, %c0_i32 : i32
    %c1_i32 = arith.constant 1 : i32
    %3 = arith.select %2, %c1_i32, %c16_i32 : i32
    %4 = vector.broadcast %3 : i32 to vector<32x1xi32>
    %5 = arith.remsi %1, %4 : vector<32x1xi32>
    %c0_i32_1 = arith.constant 0 : i32
    %6 = vector.broadcast %c0_i32_1 : i32 to vector<32x1xi32>
    %7 = arith.cmpi ne, %5, %6 : vector<32x1xi32>
    %c0_i32_2 = arith.constant 0 : i32
    %8 = vector.broadcast %c0_i32_2 : i32 to vector<32x1xi32>
    %9 = arith.cmpi slt, %5, %8 : vector<32x1xi32>
    %c0_i32_3 = arith.constant 0 : i32
    %10 = arith.cmpi slt, %3, %c0_i32_3 : i32
    %11 = vector.broadcast %10 : i1 to vector<32x1xi1>
    %12 = vector.broadcast %11 : vector<32x1xi1> to vector<32x1xi1>
    %13 = arith.xori %9, %12 : vector<32x1xi1>
    %14 = arith.andi %13, %7 : vector<32x1xi1>
    %15 = vector.broadcast %3 : i32 to vector<32x1xi32>
    %16 = arith.addi %5, %15 : vector<32x1xi32>
    %17 = arith.select %14, %16, %5 : vector<32x1xi1>, vector<32x1xi32>
    %c0_i32_4 = arith.constant 0 : i32
    %18 = vector.broadcast %c0_i32_4 : i32 to vector<32x1xi32>
    %19 = arith.cmpi ne, %17, %18 : vector<32x1xi32>
    %c16_i32_5 = arith.constant 16 : i32
    %c0_i32_6 = arith.constant 0 : i32
    %20 = arith.cmpi eq, %c16_i32_5, %c0_i32_6 : i32
    %c1_i32_7 = arith.constant 1 : i32
    %21 = arith.select %20, %c1_i32_7, %c16_i32_5 : i32
    %22 = vector.broadcast %21 : i32 to vector<32x1xi32>
    %23 = arith.remsi %1, %22 : vector<32x1xi32>
    %c0_i32_8 = arith.constant 0 : i32
    %24 = vector.broadcast %c0_i32_8 : i32 to vector<32x1xi32>
    %25 = arith.cmpi ne, %23, %24 : vector<32x1xi32>
    %c0_i32_9 = arith.constant 0 : i32
    %26 = vector.broadcast %c0_i32_9 : i32 to vector<32x1xi32>
    %27 = arith.cmpi slt, %23, %26 : vector<32x1xi32>
    %c0_i32_10 = arith.constant 0 : i32
    %28 = arith.cmpi slt, %21, %c0_i32_10 : i32
    %29 = vector.broadcast %28 : i1 to vector<32x1xi1>
    %30 = vector.broadcast %29 : vector<32x1xi1> to vector<32x1xi1>
    %31 = arith.xori %27, %30 : vector<32x1xi1>
    %32 = arith.andi %31, %25 : vector<32x1xi1>
    %33 = vector.broadcast %21 : i32 to vector<32x1xi32>
    %34 = arith.addi %23, %33 : vector<32x1xi32>
    %35 = arith.select %32, %34, %23 : vector<32x1xi1>, vector<32x1xi32>
    %c15_i32 = arith.constant 15 : i32
    %36 = vector.broadcast %c15_i32 : i32 to vector<32x1xi32>
    %37 = arith.cmpi ne, %35, %36 : vector<32x1xi32>
    %c1_i32_11 = arith.constant 1 : i32
    %38 = tpu.dynamic_rotate %0 by %c1_i32_11 dim 0 : vector<32x128xf32>, i32 -> vector<32x128xf32>
    %cst = arith.constant 0.000000e+00 : f32
    %39 = vector.shape_cast %19 : vector<32x1xi1> to vector<32x1xi1>
    %40 = vector.broadcast %39 : vector<32x1xi1> to vector<32x128xi1>
    %41 = vector.broadcast %cst : f32 to vector<32x128xf32>
    %42 = arith.select %40, %38, %41 : vector<32x128xi1>, vector<32x128xf32>
    %c31_i32 = arith.constant 31 : i32
    %43 = tpu.dynamic_rotate %0 by %c31_i32 dim 0 : vector<32x128xf32>, i32 -> vector<32x128xf32>
    %cst_12 = arith.constant 0.000000e+00 : f32
    %44 = vector.shape_cast %37 : vector<32x1xi1> to vector<32x1xi1>
    %45 = vector.broadcast %44 : vector<32x1xi1> to vector<32x128xi1>
    %46 = vector.broadcast %cst_12 : f32 to vector<32x128xf32>
    %47 = arith.select %45, %43, %46 : vector<32x128xi1>, vector<32x128xf32>
    %48 = arith.truncf %0 : vector<32x128xf32> to vector<32x128xbf16>
    %c1 = arith.constant 1 : index
    %c0_13 = arith.constant 0 : index
    %c0_14 = arith.constant 0 : index
    %49 = vector.load %arg2[%c1, %c0_13, %c0_14] : memref<3x128x128xbf16, #tpu.memory_space<vmem>>, vector<1x128x128xbf16>
    %50 = vector.shape_cast %49 : vector<1x128x128xbf16> to vector<128x128xbf16>
    %cst_15 = arith.constant dense<0.000000e+00> : vector<32x128xf32>
    %51 = tpu.matmul %48, %50, %cst_15 {dimension_numbers = #tpu.dot_dimension_numbers<[1], [0], [0], [1], [0, 0, 1, 1], [], []>} : vector<32x128xbf16>, vector<128x128xbf16>, vector<32x128xf32> -> vector<32x128xf32>
    %52 = arith.truncf %42 : vector<32x128xf32> to vector<32x128xbf16>
    %c0_16 = arith.constant 0 : index
    %c0_17 = arith.constant 0 : index
    %c0_18 = arith.constant 0 : index
    %53 = vector.load %arg2[%c0_16, %c0_17, %c0_18] : memref<3x128x128xbf16, #tpu.memory_space<vmem>>, vector<1x128x128xbf16>
    %54 = vector.shape_cast %53 : vector<1x128x128xbf16> to vector<128x128xbf16>
    %cst_19 = arith.constant dense<0.000000e+00> : vector<32x128xf32>
    %55 = tpu.matmul %52, %54, %cst_19 {dimension_numbers = #tpu.dot_dimension_numbers<[1], [0], [0], [1], [0, 0, 1, 1], [], []>} : vector<32x128xbf16>, vector<128x128xbf16>, vector<32x128xf32> -> vector<32x128xf32>
    %56 = arith.addf %51, %55 : vector<32x128xf32>
    %57 = arith.truncf %47 : vector<32x128xf32> to vector<32x128xbf16>
    %c2 = arith.constant 2 : index
    %c0_20 = arith.constant 0 : index
    %c0_21 = arith.constant 0 : index
    %58 = vector.load %arg2[%c2, %c0_20, %c0_21] : memref<3x128x128xbf16, #tpu.memory_space<vmem>>, vector<1x128x128xbf16>
    %59 = vector.shape_cast %58 : vector<1x128x128xbf16> to vector<128x128xbf16>
    %cst_22 = arith.constant dense<0.000000e+00> : vector<32x128xf32>
    %60 = tpu.matmul %57, %59, %cst_22 {dimension_numbers = #tpu.dot_dimension_numbers<[1], [0], [0], [1], [0, 0, 1, 1], [], []>} : vector<32x128xbf16>, vector<128x128xbf16>, vector<32x128xf32> -> vector<32x128xf32>
    %61 = arith.addf %56, %60 : vector<32x128xf32>
    %c0_23 = arith.constant 0 : index
    %c0_24 = arith.constant 0 : index
    %62 = vector.load %arg4[%c0_23, %c0_24] : memref<1x128xf32, #tpu.memory_space<vmem>>, vector<1x128xf32>
    %63 = vector.broadcast %62 : vector<1x128xf32> to vector<32x128xf32>
    %64 = arith.addf %61, %63 : vector<32x128xf32>
    %cst_25 = arith.constant 0.000000e+00 : f32
    %65 = vector.broadcast %cst_25 : f32 to vector<32x128xf32>
    %66 = arith.maximumf %64, %65 : vector<32x128xf32>
    %c1_i32_26 = arith.constant 1 : i32
    %67 = tpu.dynamic_rotate %66 by %c1_i32_26 dim 0 : vector<32x128xf32>, i32 -> vector<32x128xf32>
    %cst_27 = arith.constant 0.000000e+00 : f32
    %68 = vector.shape_cast %19 : vector<32x1xi1> to vector<32x1xi1>
    %69 = vector.broadcast %68 : vector<32x1xi1> to vector<32x128xi1>
    %70 = vector.broadcast %cst_27 : f32 to vector<32x128xf32>
    %71 = arith.select %69, %67, %70 : vector<32x128xi1>, vector<32x128xf32>
    %c31_i32_28 = arith.constant 31 : i32
    %72 = tpu.dynamic_rotate %66 by %c31_i32_28 dim 0 : vector<32x128xf32>, i32 -> vector<32x128xf32>
    %cst_29 = arith.constant 0.000000e+00 : f32
    %73 = vector.shape_cast %37 : vector<32x1xi1> to vector<32x1xi1>
    %74 = vector.broadcast %73 : vector<32x1xi1> to vector<32x128xi1>
    %75 = vector.broadcast %cst_29 : f32 to vector<32x128xf32>
    %76 = arith.select %74, %72, %75 : vector<32x128xi1>, vector<32x128xf32>
    %77 = arith.truncf %66 : vector<32x128xf32> to vector<32x128xbf16>
    %c1_30 = arith.constant 1 : index
    %c0_31 = arith.constant 0 : index
    %c0_32 = arith.constant 0 : index
    %78 = vector.load %arg3[%c1_30, %c0_31, %c0_32] : memref<3x128x128xbf16, #tpu.memory_space<vmem>>, vector<1x128x128xbf16>
    %79 = vector.shape_cast %78 : vector<1x128x128xbf16> to vector<128x128xbf16>
    %cst_33 = arith.constant dense<0.000000e+00> : vector<32x128xf32>
    %80 = tpu.matmul %77, %79, %cst_33 {dimension_numbers = #tpu.dot_dimension_numbers<[1], [0], [0], [1], [0, 0, 1, 1], [], []>} : vector<32x128xbf16>, vector<128x128xbf16>, vector<32x128xf32> -> vector<32x128xf32>
    %81 = arith.truncf %71 : vector<32x128xf32> to vector<32x128xbf16>
    %c0_34 = arith.constant 0 : index
    %c0_35 = arith.constant 0 : index
    %c0_36 = arith.constant 0 : index
    %82 = vector.load %arg3[%c0_34, %c0_35, %c0_36] : memref<3x128x128xbf16, #tpu.memory_space<vmem>>, vector<1x128x128xbf16>
    %83 = vector.shape_cast %82 : vector<1x128x128xbf16> to vector<128x128xbf16>
    %cst_37 = arith.constant dense<0.000000e+00> : vector<32x128xf32>
    %84 = tpu.matmul %81, %83, %cst_37 {dimension_numbers = #tpu.dot_dimension_numbers<[1], [0], [0], [1], [0, 0, 1, 1], [], []>} : vector<32x128xbf16>, vector<128x128xbf16>, vector<32x128xf32> -> vector<32x128xf32>
    %85 = arith.addf %80, %84 : vector<32x128xf32>
    %86 = arith.truncf %76 : vector<32x128xf32> to vector<32x128xbf16>
    %c2_38 = arith.constant 2 : index
    %c0_39 = arith.constant 0 : index
    %c0_40 = arith.constant 0 : index
    %87 = vector.load %arg3[%c2_38, %c0_39, %c0_40] : memref<3x128x128xbf16, #tpu.memory_space<vmem>>, vector<1x128x128xbf16>
    %88 = vector.shape_cast %87 : vector<1x128x128xbf16> to vector<128x128xbf16>
    %cst_41 = arith.constant dense<0.000000e+00> : vector<32x128xf32>
    %89 = tpu.matmul %86, %88, %cst_41 {dimension_numbers = #tpu.dot_dimension_numbers<[1], [0], [0], [1], [0, 0, 1, 1], [], []>} : vector<32x128xbf16>, vector<128x128xbf16>, vector<32x128xf32> -> vector<32x128xf32>
    %90 = arith.addf %85, %89 : vector<32x128xf32>
    %c0_42 = arith.constant 0 : index
    %c0_43 = arith.constant 0 : index
    %91 = vector.load %arg5[%c0_42, %c0_43] : memref<1x128xf32, #tpu.memory_space<vmem>>, vector<1x128xf32>
    %92 = vector.broadcast %91 : vector<1x128xf32> to vector<32x128xf32>
    %93 = arith.addf %90, %92 : vector<32x128xf32>
    %94 = arith.addf %93, %0 : vector<32x128xf32>
    %c0_44 = arith.constant 0 : index
    %c0_45 = arith.constant 0 : index
    %95 = vector.load %arg6[%c0_44, %c0_45] : memref<32x128xf32, #tpu.memory_space<vmem>>, vector<32x128xf32>
    tpu.vector_store %arg6[%c0_44, %c0_45], %94 {strides = array<i32>} : memref<32x128xf32, #tpu.memory_space<vmem>>, vector<32x128xf32>,
    return
  }
  func.func @transform_0(%arg0: i32) -> (i32, i32) {
    %c0_i32 = arith.constant 0 : i32
    %c0_i32_0 = arith.constant 0 : i32
    return %arg0, %c0_i32 : i32, i32
  }
  func.func @transform_1(%arg0: i32) -> (i32, i32, i32) {
    %c0_i32 = arith.constant 0 : i32
    %c0_i32_0 = arith.constant 0 : i32
    %c0_i32_1 = arith.constant 0 : i32
    %c0_i32_2 = arith.constant 0 : i32
    return %c0_i32, %c0_i32_0, %c0_i32_1 : i32, i32, i32
  }
  func.func @transform_2(%arg0: i32) -> (i32, i32, i32) {
    %c0_i32 = arith.constant 0 : i32
    %c0_i32_0 = arith.constant 0 : i32
    %c0_i32_1 = arith.constant 0 : i32
    %c0_i32_2 = arith.constant 0 : i32
    return %c0_i32, %c0_i32_0, %c0_i32_1 : i32, i32, i32
  }
  func.func @transform_3(%arg0: i32) -> (i32, i32) {
    %c0_i32 = arith.constant 0 : i32
    %c0_i32_0 = arith.constant 0 : i32
    %c0_i32_1 = arith.constant 0 : i32
    return %c0_i32, %c0_i32_0 : i32, i32
  }
  func.func @transform_4(%arg0: i32) -> (i32, i32) {
    %c0_i32 = arith.constant 0 : i32
    %c0_i32_0 = arith.constant 0 : i32
    %c0_i32_1 = arith.constant 0 : i32
    return %c0_i32, %c0_i32_0 : i32, i32
  }
  func.func @transform_5(%arg0: i32) -> (i32, i32) {
    %c0_i32 = arith.constant 0 : i32
    %c0_i32_0 = arith.constant 0 : i32
    return %arg0, %c0_i32 : i32, i32
  }
}

</mosaic_0001>

<llo_original>
// kernel: tpu_custom_call.1
$region0: #{tpu_custom_call.1}
  #allocation0 [shape = 'u32[]', space=smem, size = 0x4, offset = 0x4, fixed_abs, tag = 'smem constant byte address 0x4 - core index']
  #allocation1 [shape = 'u32[72,128]{1,0:T(1,128)}', space=vmem, size = 0x9000, scoped, tag = 'internal scratch']
  %s0 = inlined_call_operand.hbm [shape: f32[64,128], index: 0, kind: input, shape index: {}]
  %s1 = inlined_call_operand.hbm [shape: bf16[3,128,128], index: 1, kind: input, shape index: {}]
  %s2 = inlined_call_operand.hbm [shape: bf16[3,128,128], index: 2, kind: input, shape index: {}]
  %s3 = inlined_call_operand.vmem [shape: f32[1,128], index: 3, kind: input, shape index: {}]
  %s4 = inlined_call_operand.vmem [shape: f32[1,128], index: 4, kind: input, shape index: {}]
  %s5 = inlined_call_operand.hbm [shape: f32[64,128], index: 5, kind: output, shape index: {}]
  %s6 = sld [smem:[#allocation0]]
  $region65: #{tpu_custom_call.1} parent=0
    _
  %s8 = ssub.s32 1, %s6
  %s9 = scalar_select 0, %s8, %s6
  $region1: #{tpu_custom_call.1} parent=0
    #allocation2 [shape = 'u8[32768]{0}', space=vmem, size = 0x8000, scoped, tag = 'input window, operand 0']
    #allocation3 [shape = 's32[2]{0}', space=sflag, size = 0x8, scoped, tag = 'scoped memory for tpu_custom_call.1']
    #allocation4 [shape = 's32[2]{0}', space=sflag, size = 0x8, scoped, tag = 'scoped memory for tpu_custom_call.1']
    #allocation5 [shape = 'u8[98304]{0}', space=vmem, size = 0x18000, scoped, tag = 'input window, operand 1, single buffered']
    #allocation6 [shape = 's32[1]{0}', space=sflag, size = 0x4, scoped, tag = 'scoped memory for tpu_custom_call.1']
    #allocation7 [shape = 'u8[98304]{0}', space=vmem, size = 0x18000, scoped, tag = 'input window, operand 2, single buffered']
    #allocation8 [shape = 'u8[32768]{0}', space=vmem, size = 0x8000, scoped, tag = 'output window, operand 0']
    %10 = vsyncpa [#allocation3], 0
    %s11 = scalar_lea.sflag [#allocation3], 1
    %12 = vsyncpa %s11, 0
    %13 = vsyncpa [#allocation6], 0
    %14 = vsyncpa [#allocation4], 0
    %s15 = scalar_lea.sflag [#allocation4], 1
    %16 = vsyncpa %s15, 0
    loop: start=0, step=1, limit=4
    $region2: #{tpu_custom_call.1} parent=1 // loop_pre_header
      _
    $region3: #{tpu_custom_call.1} parent=1 // loop_header
      %s18 = sphi 0, %s22
      %p19 = scmp.ge.s32.totalorder %s18, 4
      %s28 = sphi 0, %s30
      %s31 = sphi 0, %s28
      %s32 = sphi 0, %s31
      %s48 = sphi 0, %s32
      %s52 = sphi 0, %s52
      %s54 = sphi 0, %s52
      %s55 = sphi 0, %s54
      %s69 = sphi 0, %s55
      %s73 = sphi 0, %s73
      %s75 = sphi 0, %s73
      %s76 = sphi 0, %s75
      %s90 = sphi 0, %s76
      %s94 = sphi 0, %s94
      %s96 = sphi 0, %s94
      %s97 = sphi 0, %s96
      %s111 = sphi 0, %s97
      %s115 = sphi 0, %s115
      %s117 = sphi 0, %s115
      %s118 = sphi 0, %s117
      %s132 = sphi 0, %s118
      %s138 = sphi 0, %s140
      %s141 = sphi 0, %s138
      %s142 = sphi 0, %s141
      %s158 = sphi 0, %s142
    $region4: #{tpu_custom_call.1} parent=1 // loop_header_branch
      %21 = sbr.rel (%p19) target = $region8
    $region5: #{tpu_custom_call.1} parent=1 // loop_body
      %s23 = ssub.s32 %s18, 1
      %s24 = ssub.s32 %s18, 2
      %s25 = sadd.s32 %s18, 1
      %s26 = ssub.s32 %s18, %s25
      %p27 = scmp.eq.s32.totalorder %s26, 0
      %s29 = sadd.s32 %s28, 1
      %s30 = scalar_select %p27, %s28, %s29
      %p33 = pneg %p27
      %p34 = scmp.eq.s32.totalorder %s18, 1
      %p35 = por %p33, %p34
      %p36 = scmp.ne.s32.totalorder %s28, %s31
      %p37 = scmp.eq.s32.totalorder %s18, 0
      %p38 = por %p36, %p37
      %p39 = scmp.ne.s32.totalorder %s28, %s31
      %p40 = scmp.eq.s32.totalorder %s23, 1
      %p41 = por %p39, %p40
      %p42 = scmp.ne.s32.totalorder %s31, %s32
      %p43 = scmp.eq.s32.totalorder %s23, 0
      %p44 = por %p42, %p43
      %p45 = scmp.ne.s32.totalorder %s31, %s32
      %p46 = scmp.eq.s32.totalorder %s24, 1
      %p47 = por %p45, %p46
      %p49 = scmp.ne.s32.totalorder %s32, %s48
      %p50 = scmp.eq.s32.totalorder %s24, 0
      %p51 = por %p49, %p50
      %s53 = sadd.s32 %s52, 1
      %p56 = scmp.eq.s32.totalorder %s18, 1
      %p57 = scmp.ne.s32.totalorder %s52, %s54
      %p58 = scmp.eq.s32.totalorder %s18, 0
      %p59 = por %p57, %p58
      %p60 = scmp.ne.s32.totalorder %s52, %s54
      %p61 = scmp.eq.s32.totalorder %s23, 1
      %p62 = por %p60, %p61
      %p63 = scmp.ne.s32.totalorder %s54, %s55
      %p64 = scmp.eq.s32.totalorder %s23, 0
      %p65 = por %p63, %p64
      %p66 = scmp.ne.s32.totalorder %s54, %s55
      %p67 = scmp.eq.s32.totalorder %s24, 1
      %p68 = por %p66, %p67
      %p70 = scmp.ne.s32.totalorder %s55, %s69
      %p71 = scmp.eq.s32.totalorder %s24, 0
      %p72 = por %p70, %p71
      %s74 = sadd.s32 %s73, 1
      %p77 = scmp.eq.s32.totalorder %s18, 1
      %p78 = scmp.ne.s32.totalorder %s73, %s75
      %p79 = scmp.eq.s32.totalorder %s18, 0
      %p80 = por %p78, %p79
      %p81 = scmp.ne.s32.totalorder %s73, %s75
      %p82 = scmp.eq.s32.totalorder %s23, 1
      %p83 = por %p81, %p82
      %p84 = scmp.ne.s32.totalorder %s75, %s76
      %p85 = scmp.eq.s32.totalorder %s23, 0
      %p86 = por %p84, %p85
      %p87 = scmp.ne.s32.totalorder %s75, %s76
      %p88 = scmp.eq.s32.totalorder %s24, 1
      %p89 = por %p87, %p88
      %p91 = scmp.ne.s32.totalorder %s76, %s90
      %p92 = scmp.eq.s32.totalorder %s24, 0
      %p93 = por %p91, %p92
      %s95 = sadd.s32 %s94, 1
      %p98 = scmp.eq.s32.totalorder %s18, 1
      %p99 = scmp.ne.s32.totalorder %s94, %s96
      %p100 = scmp.eq.s32.totalorder %s18, 0
      %p101 = por %p99, %p100
      %p102 = scmp.ne.s32.totalorder %s94, %s96
      %p103 = scmp.eq.s32.totalorder %s23, 1
      %p104 = por %p102, %p103
      %p105 = scmp.ne.s32.totalorder %s96, %s97
      %p106 = scmp.eq.s32.totalorder %s23, 0
      %p107 = por %p105, %p106
      %p108 = scmp.ne.s32.totalorder %s96, %s97
      %p109 = scmp.eq.s32.totalorder %s24, 1
      %p110 = por %p108, %p109
      %p112 = scmp.ne.s32.totalorder %s97, %s111
      %p113 = scmp.eq.s32.totalorder %s24, 0
      %p114 = por %p112, %p113
      %s116 = sadd.s32 %s115, 1
      %p119 = scmp.eq.s32.totalorder %s18, 1
      %p120 = scmp.ne.s32.totalorder %s115, %s117
      %p121 = scmp.eq.s32.totalorder %s18, 0
      %p122 = por %p120, %p121
      %p123 = scmp.ne.s32.totalorder %s115, %s117
      %p124 = scmp.eq.s32.totalorder %s23, 1
      %p125 = por %p123, %p124
      %p126 = scmp.ne.s32.totalorder %s117, %s118
      %p127 = scmp.eq.s32.totalorder %s23, 0
      %p128 = por %p126, %p127
      %p129 = scmp.ne.s32.totalorder %s117, %s118
      %p130 = scmp.eq.s32.totalorder %s24, 1
      %p131 = por %p129, %p130
      %p133 = scmp.ne.s32.totalorder %s118, %s132
      %p134 = scmp.eq.s32.totalorder %s24, 0
      %p135 = por %p133, %p134
      %s136 = ssub.s32 %s18, %s25
      %p137 = scmp.eq.s32.totalorder %s136, 0
      %s139 = sadd.s32 %s138, 1
      %s140 = scalar_select %p137, %s138, %s139
      %p143 = pneg %p137
      %p144 = scmp.eq.s32.totalorder %s18, 1
      %p145 = por %p143, %p144
      %p146 = scmp.ne.s32.totalorder %s138, %s141
      %p147 = scmp.eq.s32.totalorder %s18, 0
      %p148 = por %p146, %p147
      %p149 = scmp.ne.s32.totalorder %s138, %s141
      %p150 = scmp.eq.s32.totalorder %s23, 1
      %p151 = por %p149, %p150
      %p152 = scmp.ne.s32.totalorder %s141, %s142
      %p153 = scmp.eq.s32.totalorder %s23, 0
      %p154 = por %p152, %p153
      %p155 = scmp.ne.s32.totalorder %s141, %s142
      %p156 = scmp.eq.s32.totalorder %s24, 1
      %p157 = por %p155, %p156
      %p159 = scmp.ne.s32.totalorder %s142, %s158
      %p160 = scmp.eq.s32.totalorder %s24, 0
      %p161 = por %p159, %p160
      %p162 = scmp.le.s32.totalorder 1, %s18
      %p163 = scmp.lt.s32.totalorder %s18, 3
      %p164 = pnand %p162, %p163
      %p165 = pneg %p164
      // Predicated region
      $region9: #{tpu_custom_call.1} parent=5 // pred_check
        _
      $region10: #{tpu_custom_call.1} parent=5 // pred_check_branch
        %167 = sbr.rel (%p164) target = $region12
      $region11: #{tpu_custom_call.1} parent=5 // pred_region
        %s168 = ssub.s32 %s18, 1
        // Predicated region
        $region13: #{tpu_custom_call.1} parent=11 // pred_check
          %p169 = pneg %p65
        $region14: #{tpu_custom_call.1} parent=11 // pred_check_branch
          %171 = sbr.rel (%p169) target = $region16
        $region15: #{tpu_custom_call.1} parent=11 // pred_region
          %173 = vsyncadd [#allocation6], 0
          %s174 = sshll.u32 %s1, 4
          %s175 = int_to_ptr.hbm [resolvable:$true] %s174
          %s176 = sshll.u32 [#allocation5], 4
          %s177 = int_to_ptr.vmem [resolvable:$true] %s176
          %182 = dma.hbm_to_vmem [thread:$0]  %s175, 3072, %s177, [#allocation6], 64, 64, 4
        $region16: #{tpu_custom_call.1} parent=11 // pred_fallthru
          _
        // Predicated region
        $region17: #{tpu_custom_call.1} parent=11 // pred_check
          %p183 = pneg %p86
        $region18: #{tpu_custom_call.1} parent=11 // pred_check_branch
          %185 = sbr.rel (%p183) target = $region20
        $region19: #{tpu_custom_call.1} parent=11 // pred_region
          %187 = vsyncadd [#allocation6], 0
          %s188 = sshll.u32 %s2, 4
          %s189 = int_to_ptr.hbm [resolvable:$true] %s188
          %s190 = sshll.u32 [#allocation7], 4
          %s191 = int_to_ptr.vmem [resolvable:$true] %s190
          %196 = dma.hbm_to_vmem [thread:$0]  %s189, 3072, %s191, [#allocation6], 64, 64, 4
        $region20: #{tpu_custom_call.1} parent=11 // pred_fallthru
          _
        // Predicated region
        $region21: #{tpu_custom_call.1} parent=11 // pred_check
          %p197 = pneg %p107
        $region22: #{tpu_custom_call.1} parent=11 // pred_check_branch
          %199 = sbr.rel (%p197) target = $region24
        $region23: #{tpu_custom_call.1} parent=11 // pred_region
          _
        $region24: #{tpu_custom_call.1} parent=11 // pred_fallthru
          _
        // Predicated region
        $region25: #{tpu_custom_call.1} parent=11 // pred_check
          %p200 = pneg %p128
        $region26: #{tpu_custom_call.1} parent=11 // pred_check_branch
          %202 = sbr.rel (%p200) target = $region28
        $region27: #{tpu_custom_call.1} parent=11 // pred_region
          _
        $region28: #{tpu_custom_call.1} parent=11 // pred_fallthru
          _
      $region12: #{tpu_custom_call.1} parent=5 // pred_fallthru
        _
      %p203 = scmp.lt.s32.totalorder %s18, 2
      // Predicated region
      $region29: #{tpu_custom_call.1} parent=5 // pred_check
        %p204 = pneg %p203
      $region30: #{tpu_custom_call.1} parent=5 // pred_check_branch
        %206 = sbr.rel (%p204) target = $region32
      $region31: #{tpu_custom_call.1} parent=5 // pred_region
        // Predicated region
        $region33: #{tpu_custom_call.1} parent=31 // pred_check
          %p207 = pneg %p38
        $region34: #{tpu_custom_call.1} parent=31 // pred_check_branch
          %209 = sbr.rel (%p207) target = $region36
        $region35: #{tpu_custom_call.1} parent=31 // pred_region
          %s210 = sand.u32 %s28, 1
          %s211 = scalar_lea.sflag [#allocation3], %s210
          %s212 = sand.u32 %s28, 1
          %s213 = smul.addr %s212, 32
          %s214 = scalar_lea.vmem [#allocation2], %s213
          %s215 = smul.u32 4, %s18
          %217 = vsyncadd %s211, 0
          %s218 = smul.addr %s215, 8
          %s219 = scalar_lea.hbm %s0, %s218
          %s220 = sshll.u32 %s219, 4
          %s221 = int_to_ptr.hbm [resolvable:$true] %s220
          %s222 = sshll.u32 %s214, 4
          %s223 = int_to_ptr.vmem [resolvable:$true] %s222
          %228 = dma.hbm_to_vmem [thread:$0]  %s221, 512, %s223, %s211, 128, 128, 8
        $region36: #{tpu_custom_call.1} parent=31 // pred_fallthru
          _
      $region32: #{tpu_custom_call.1} parent=5 // pred_fallthru
        _
      %p229 = scmp.le.s32.totalorder 1, %s18
      %p230 = scmp.lt.s32.totalorder %s18, 3
      %p231 = pnand %p229, %p230
      %p232 = pneg %p231
      // Predicated region
      $region37: #{tpu_custom_call.1} parent=5 // pred_check
        _
      $region38: #{tpu_custom_call.1} parent=5 // pred_check_branch
        %234 = sbr.rel (%p231) target = $region40
      $region39: #{tpu_custom_call.1} parent=5 // pred_region
        %s235 = ssub.s32 %s18, 1
        %s236 = sand.u32 %s31, 1
        %s237 = scalar_lea.sflag [#allocation3], %s236
        %s238 = sand.u32 %s31, 1
        %s239 = smul.addr %s238, 32
        %s240 = scalar_lea.vmem [#allocation2], %s239
        // Predicated region
        $region41: #{tpu_custom_call.1} parent=39 // pred_check
          %p241 = pneg %p44
        $region42: #{tpu_custom_call.1} parent=39 // pred_check_branch
          %243 = sbr.rel (%p241) target = $region44
        $region43: #{tpu_custom_call.1} parent=39 // pred_region
          %245 = dma.done %s237, 512
        $region44: #{tpu_custom_call.1} parent=39 // pred_fallthru
          _
        // Predicated region
        $region45: #{tpu_custom_call.1} parent=39 // pred_check
          %p246 = pneg %p65
        $region46: #{tpu_custom_call.1} parent=39 // pred_check_branch
          %248 = sbr.rel (%p246) target = $region48
        $region47: #{tpu_custom_call.1} parent=39 // pred_region
          %250 = dma.done [#allocation6], 3072
        $region48: #{tpu_custom_call.1} parent=39 // pred_fallthru
          _
        // Predicated region
        $region49: #{tpu_custom_call.1} parent=39 // pred_check
          %p251 = pneg %p86
        $region50: #{tpu_custom_call.1} parent=39 // pred_check_branch
          %253 = sbr.rel (%p251) target = $region52
        $region51: #{tpu_custom_call.1} parent=39 // pred_region
          %255 = dma.done [#allocation6], 3072
        $region52: #{tpu_custom_call.1} parent=39 // pred_fallthru
          _
        %s256 = sand.u32 %s31, 1
        %s257 = scalar_lea.sflag [#allocation3], %s256
        %s258 = sand.u32 %s31, 1
        %s259 = smul.addr %s258, 32
        %s260 = scalar_lea.vmem [#allocation2], %s259
        %p261 = pneg %p44
        %p262 = pneg %p41
        %p263 = pneg %p65
        %p264 = pneg %p62
        %p265 = pneg %p86
        %p266 = pneg %p83
        %p267 = pneg %p107
        %p268 = pneg %p104
        %p269 = pneg %p128
        %p270 = pneg %p125
        %p271 = pneg %p154
        %p272 = pneg %p151
        %s273 = sand.u32 %s141, 1
        %s274 = scalar_lea.sflag [#allocation4], %s273
        %s275 = sand.u32 %s141, 1
        %s276 = smul.addr %s275, 32
        %s277 = scalar_lea.vmem [#allocation8], %s276
        %s278 = smul.u32 4, %s23
        %s279 = smul.u32 4, %s23
        %v280 = vld [vmem:[%s240] sm:$0xff]
        %v281 = vld [vmem:[%s240 + $0x8] sm:$0xff]
        %v282 = vld [vmem:[%s240 + $0x10] sm:$0xff]
        %v283 = vld [vmem:[%s240 + $0x18] sm:$0xff]
        %v284 = vlaneseq
        %v285 = vshrl.u32 %v284, 7
        %v286 = vadd.s32 %v285, 8
        %v287 = vadd.s32 %v285, 16
        %v288 = vadd.s32 %v285, 24
        %vm289 = vcmp.lt.s32.totalorder %v285, 0
        %v290 = vsub.s32 0, %v285
        %v291 = vsel %vm289, %v290, %v285
        %v292 = vshrl.u32 %v291, 4
        %v293 = vand.u32 %v291, 15
        %v294 = vsub.s32 0, %v293
        %v295 = vsel %vm289, %v294, %v293
        %vm296 = vcmp.lt.s32.totalorder %v286, 0
        %v297 = vsub.s32 0, %v286
        %v298 = vsel %vm296, %v297, %v286
        %v299 = vshrl.u32 %v298, 4
        %v300 = vand.u32 %v298, 15
        %v301 = vsub.s32 0, %v300
        %v302 = vsel %vm296, %v301, %v300
        %vm303 = vcmp.lt.s32.totalorder %v287, 0
        %v304 = vsub.s32 0, %v287
        %v305 = vsel %vm303, %v304, %v287
        %v306 = vshrl.u32 %v305, 4
        %v307 = vand.u32 %v305, 15
        %v308 = vsub.s32 0, %v307
        %v309 = vsel %vm303, %v308, %v307
        %vm310 = vcmp.lt.s32.totalorder %v288, 0
        %v311 = vsub.s32 0, %v288
        %v312 = vsel %vm310, %v311, %v288
        %v313 = vshrl.u32 %v312, 4
        %v314 = vand.u32 %v312, 15
        %v315 = vsub.s32 0, %v314
        %v316 = vsel %vm310, %v315, %v314
        %vm317 = vcmp.ne.s32.totalorder %v295, 0
        %vm318 = vcmp.ne.s32.totalorder %v302, 0
        %vm319 = vcmp.ne.s32.totalorder %v309, 0
        %vm320 = vcmp.ne.s32.totalorder %v316, 0
        %vm321 = vcmp.lt.s32.totalorder %v295, 0
        %vm322 = vcmp.lt.s32.totalorder %v302, 0
        %vm323 = vcmp.lt.s32.totalorder %v309, 0
        %vm324 = vcmp.lt.s32.totalorder %v316, 0
        %vm325 = vmand %vm321, %vm317
        %vm326 = vmand %vm322, %vm318
        %vm327 = vmand %vm323, %vm319
        %vm328 = vmand %vm324, %vm320
        %v329 = vadd.s32 %v295, 16
        %v330 = vadd.s32 %v302, 16
        %v331 = vadd.s32 %v309, 16
        %v332 = vadd.s32 %v316, 16
        %v333 = vsel %vm325, %v329, %v295
        %v334 = vsel %vm326, %v330, %v302
        %v335 = vsel %vm327, %v331, %v309
        %v336 = vsel %vm328, %v332, %v316
        %vm337 = vcmp.ne.s32.totalorder %v333, 0
        %vm338 = vcmp.ne.s32.totalorder %v334, 0
        %vm339 = vcmp.ne.s32.totalorder %v335, 0
        %vm340 = vcmp.ne.s32.totalorder %v336, 0
        %vm341 = vcmp.ne.s32.totalorder %v333, 15
        %vm342 = vcmp.ne.s32.totalorder %v334, 15
        %vm343 = vcmp.ne.s32.totalorder %v335, 15
        %vm344 = vcmp.ne.s32.totalorder %v336, 15
        %v345 = vrot.slane %v280, 7
        %v346 = vrot.slane %v281, 7
        %v347 = vrot.slane %v282, 7
        %v348 = vrot.slane %v283, 7
        %vm349 = vcmp.lt.s32.totalorder %v285, 1
        %v350 = vsel %vm349, %v347, %v348
        %v351 = vsel %vm349, %v346, %v347
        %v352 = vsel %vm349, %v345, %v346
        %v353 = vsel %vm349, %v348, %v345
        %v354 = vsel %vm337, 1, 0
        %v355 = vsel %vm338, 1, 0
        %v356 = vsel %vm339, 1, 0
        %v357 = vsel %vm340, 1, 0
        %vm358 = vcmp.eq.s32.totalorder %v354, 1
        %vm359 = vcmp.eq.s32.totalorder %v355, 1
        %vm360 = vcmp.eq.s32.totalorder %v356, 1
        %vm361 = vcmp.eq.s32.totalorder %v357, 1
        %v362 = vsel %vm358, %v353, 0.0
        %v363 = vsel %vm359, %v352, 0.0
        %v364 = vsel %vm360, %v351, 0.0
        %v365 = vsel %vm361, %v350, 0.0
        %v366 = vrot.slane %v280, 1
        %v367 = vrot.slane %v281, 1
        %v368 = vrot.slane %v282, 1
        %v369 = vrot.slane %v283, 1
        %vm370 = vcmp.lt.s32.totalorder %v285, 7
        %v371 = vsel %vm370, %v368, %v369
        %v372 = vsel %vm370, %v367, %v368
        %v373 = vsel %vm370, %v366, %v367
        %v374 = vsel %vm370, %v369, %v366
        %v375 = vsel %vm341, 1, 0
        %v376 = vsel %vm342, 1, 0
        %v377 = vsel %vm343, 1, 0
        %v378 = vsel %vm344, 1, 0
        %vm379 = vcmp.eq.s32.totalorder %v375, 1
        %vm380 = vcmp.eq.s32.totalorder %v376, 1
        %vm381 = vcmp.eq.s32.totalorder %v377, 1
        %vm382 = vcmp.eq.s32.totalorder %v378, 1
        %v383 = vsel %vm379, %v373, 0.0
        %v384 = vsel %vm380, %v372, 0.0
        %v385 = vsel %vm381, %v371, 0.0
        %v386 = vsel %vm382, %v374, 0.0
        %v387 = vpack.c.bf16 %v281, %v280
        %v388 = vpack.c.bf16 %v283, %v282
        %s389 = scalar_lea.vmem [#allocation5], 64
        %v390 = vld [vmem:[%s389] sm:$0xf]
        %v391 = vld [vmem:[%s389 + $0x4] sm:$0xf]
        %v392 = vld [vmem:[%s389 + $0x8] sm:$0xf]
        %v393 = vld [vmem:[%s389 + $0xc] sm:$0xf]
        %v394 = vld [vmem:[%s389 + $0x10] sm:$0xf]
        %v395 = vld [vmem:[%s389 + $0x14] sm:$0xf]
        %v396 = vld [vmem:[%s389 + $0x18] sm:$0xf]
        %v397 = vld [vmem:[%s389 + $0x1c] sm:$0xf]
        %v398 = vld [vmem:[%s389 + $0x20] sm:$0xf]
        %v399 = vld [vmem:[%s389 + $0x24] sm:$0xf]
        %v400 = vld [vmem:[%s389 + $0x28] sm:$0xf]
        %v401 = vld [vmem:[%s389 + $0x2c] sm:$0xf]
        %v402 = vld [vmem:[%s389 + $0x30] sm:$0xf]
        %v403 = vld [vmem:[%s389 + $0x34] sm:$0xf]
        %v404 = vld [vmem:[%s389 + $0x38] sm:$0xf]
        %v405 = vld [vmem:[%s389 + $0x3c] sm:$0xf]
        %v406 = vpack.c.bf16 %v363, %v362
        %v407 = vpack.c.bf16 %v365, %v364
        %v408 = vld [vmem:[#allocation5] sm:$0xf]
        %v409 = vld [vmem:[#allocation5 + $0x4] sm:$0xf]
        %v410 = vld [vmem:[#allocation5 + $0x8] sm:$0xf]
        %v411 = vld [vmem:[#allocation5 + $0xc] sm:$0xf]
        %v412 = vld [vmem:[#allocation5 + $0x10] sm:$0xf]
        %v413 = vld [vmem:[#allocation5 + $0x14] sm:$0xf]
        %v414 = vld [vmem:[#allocation5 + $0x18] sm:$0xf]
        %v415 = vld [vmem:[#allocation5 + $0x1c] sm:$0xf]
        %v416 = vld [vmem:[#allocation5 + $0x20] sm:$0xf]
        %v417 = vld [vmem:[#allocation5 + $0x24] sm:$0xf]
        %v418 = vld [vmem:[#allocation5 + $0x28] sm:$0xf]
        %v419 = vld [vmem:[#allocation5 + $0x2c] sm:$0xf]
        %v420 = vld [vmem:[#allocation5 + $0x30] sm:$0xf]
        %v421 = vld [vmem:[#allocation5 + $0x34] sm:$0xf]
        %v422 = vld [vmem:[#allocation5 + $0x38] sm:$0xf]
        %v423 = vld [vmem:[#allocation5 + $0x3c] sm:$0xf]
        %v440 = vunpack.c.l.b16 %v408
        %v441 = vunpack.c.l.b16 %v409
        %v442 = vunpack.c.l.b16 %v410
        %v443 = vunpack.c.l.b16 %v411
        %v444 = vunpack.c.l.b16 %v412
        %v445 = vunpack.c.l.b16 %v413
        %v446 = vunpack.c.l.b16 %v414
        %v447 = vunpack.c.l.b16 %v415
        %v448 = vunpack.c.l.b16 %v416
        %v449 = vunpack.c.l.b16 %v417
        %v450 = vunpack.c.l.b16 %v418
        %v451 = vunpack.c.l.b16 %v419
        %v452 = vunpack.c.l.b16 %v420
        %v453 = vunpack.c.l.b16 %v421
        %v454 = vunpack.c.l.b16 %v422
        %v455 = vunpack.c.l.b16 %v423
        %v456 = vpack.c.b16 %v441, %v440
        %v457 = vpack.c.b16 %v443, %v442
        %v458 = vpack.c.b16 %v445, %v444
        %v459 = vpack.c.b16 %v447, %v446
        %v460 = vpack.c.b16 %v449, %v448
        %v461 = vpack.c.b16 %v451, %v450
        %v462 = vpack.c.b16 %v453, %v452
        %v463 = vpack.c.b16 %v455, %v454
        %472 = vmatpush.bf16.msra.mxu0 %v463
        %473 = vmatpush.bf16.msra.mxu0 %v462
        %474 = vmatpush.bf16.msra.mxu0 %v461
        %475 = vmatpush.bf16.msra.mxu0 %v460
        %476 = vmatpush.bf16.msra.mxu0 %v459
        %477 = vmatpush.bf16.msra.mxu0 %v458
        %478 = vmatpush.bf16.msra.mxu0 %v457
        %479 = vmatpush.bf16.msra.mxu0 %v456
        %480 = vmatmul.bf16.gmra.mxu0 %v406
        %v481 = vpop.f32.mrf.mxu0
        %v482 = vadd.f32 0.0, %v481
        %v483 = vpop.f32.mrf.mxu0
        %v484 = vadd.f32 0.0, %v483
        %485 = vmatmul.bf16.gmra.mxu0 %v407
        %v486 = vpop.f32.mrf.mxu0
        %v487 = vadd.f32 0.0, %v486
        %v488 = vpop.f32.mrf.mxu0
        %v489 = vadd.f32 0.0, %v488
        %490 = vdwg.mxu0
        %v507 = vunpack.c.l.b16 %v390
        %v508 = vunpack.c.l.b16 %v391
        %v509 = vunpack.c.l.b16 %v392
        %v510 = vunpack.c.l.b16 %v393
        %v511 = vunpack.c.l.b16 %v394
        %v512 = vunpack.c.l.b16 %v395
        %v513 = vunpack.c.l.b16 %v396
        %v514 = vunpack.c.l.b16 %v397
        %v515 = vunpack.c.l.b16 %v398
        %v516 = vunpack.c.l.b16 %v399
        %v517 = vunpack.c.l.b16 %v400
        %v518 = vunpack.c.l.b16 %v401
        %v519 = vunpack.c.l.b16 %v402
        %v520 = vunpack.c.l.b16 %v403
        %v521 = vunpack.c.l.b16 %v404
        %v522 = vunpack.c.l.b16 %v405
        %v523 = vpack.c.b16 %v508, %v507
        %v524 = vpack.c.b16 %v510, %v509
        %v525 = vpack.c.b16 %v512, %v511
        %v526 = vpack.c.b16 %v514, %v513
        %v527 = vpack.c.b16 %v516, %v515
        %v528 = vpack.c.b16 %v518, %v517
        %v529 = vpack.c.b16 %v520, %v519
        %v530 = vpack.c.b16 %v522, %v521
        %539 = vmatpush.bf16.msra.mxu0 %v530
        %540 = vmatpush.bf16.msra.mxu0 %v529
        %541 = vmatpush.bf16.msra.mxu0 %v528
        %542 = vmatpush.bf16.msra.mxu0 %v527
        %543 = vmatpush.bf16.msra.mxu0 %v526
        %544 = vmatpush.bf16.msra.mxu0 %v525
        %545 = vmatpush.bf16.msra.mxu0 %v524
        %546 = vmatpush.bf16.msra.mxu0 %v523
        %547 = vmatmul.bf16.gmra.mxu0 %v387
        %v548 = vpop.f32.mrf.mxu0
        %v549 = vadd.f32 %v482, %v548
        %v550 = vpop.f32.mrf.mxu0
        %v551 = vadd.f32 %v484, %v550
        %552 = vmatmul.bf16.gmra.mxu0 %v388
        %v553 = vpop.f32.mrf.mxu0
        %v554 = vadd.f32 %v487, %v553
        %v555 = vpop.f32.mrf.mxu0
        %v556 = vadd.f32 %v489, %v555
        %557 = vdwg.mxu0
        %v558 = vpack.c.bf16 %v384, %v383
        %v559 = vpack.c.bf16 %v386, %v385
        %s560 = scalar_lea.vmem [#allocation5], 128
        %v561 = vld [vmem:[%s560] sm:$0xf]
        %v562 = vld [vmem:[%s560 + $0x4] sm:$0xf]
        %v563 = vld [vmem:[%s560 + $0x8] sm:$0xf]
        %v564 = vld [vmem:[%s560 + $0xc] sm:$0xf]
        %v565 = vld [vmem:[%s560 + $0x10] sm:$0xf]
        %v566 = vld [vmem:[%s560 + $0x14] sm:$0xf]
        %v567 = vld [vmem:[%s560 + $0x18] sm:$0xf]
        %v568 = vld [vmem:[%s560 + $0x1c] sm:$0xf]
        %v569 = vld [vmem:[%s560 + $0x20] sm:$0xf]
        %v570 = vld [vmem:[%s560 + $0x24] sm:$0xf]
        %v571 = vld [vmem:[%s560 + $0x28] sm:$0xf]
        %v572 = vld [vmem:[%s560 + $0x2c] sm:$0xf]
        %v573 = vld [vmem:[%s560 + $0x30] sm:$0xf]
        %v574 = vld [vmem:[%s560 + $0x34] sm:$0xf]
        %v575 = vld [vmem:[%s560 + $0x38] sm:$0xf]
        %v576 = vld [vmem:[%s560 + $0x3c] sm:$0xf]
        %v593 = vunpack.c.l.b16 %v561
        %v594 = vunpack.c.l.b16 %v562
        %v595 = vunpack.c.l.b16 %v563
        %v596 = vunpack.c.l.b16 %v564
        %v597 = vunpack.c.l.b16 %v565
        %v598 = vunpack.c.l.b16 %v566
        %v599 = vunpack.c.l.b16 %v567
        %v600 = vunpack.c.l.b16 %v568
        %v601 = vunpack.c.l.b16 %v569
        %v602 = vunpack.c.l.b16 %v570
        %v603 = vunpack.c.l.b16 %v571
        %v604 = vunpack.c.l.b16 %v572
        %v605 = vunpack.c.l.b16 %v573
        %v606 = vunpack.c.l.b16 %v574
        %v607 = vunpack.c.l.b16 %v575
        %v608 = vunpack.c.l.b16 %v576
        %v609 = vpack.c.b16 %v594, %v593
        %v610 = vpack.c.b16 %v596, %v595
        %v611 = vpack.c.b16 %v598, %v597
        %v612 = vpack.c.b16 %v600, %v599
        %v613 = vpack.c.b16 %v602, %v601
        %v614 = vpack.c.b16 %v604, %v603
        %v615 = vpack.c.b16 %v606, %v605
        %v616 = vpack.c.b16 %v608, %v607
        %625 = vmatpush.bf16.msra.mxu0 %v616
        %626 = vmatpush.bf16.msra.mxu0 %v615
        %627 = vmatpush.bf16.msra.mxu0 %v614
        %628 = vmatpush.bf16.msra.mxu0 %v613
        %629 = vmatpush.bf16.msra.mxu0 %v612
        %630 = vmatpush.bf16.msra.mxu0 %v611
        %631 = vmatpush.bf16.msra.mxu0 %v610
        %632 = vmatpush.bf16.msra.mxu0 %v609
        %633 = vmatmul.bf16.gmra.mxu0 %v558
        %v634 = vpop.f32.mrf.mxu0
        %v635 = vadd.f32 0.0, %v634
        %v636 = vpop.f32.mrf.mxu0
        %v637 = vadd.f32 0.0, %v636
        %638 = vmatmul.bf16.gmra.mxu0 %v559
        %v639 = vpop.f32.mrf.mxu0
        %v640 = vadd.f32 0.0, %v639
        %v641 = vpop.f32.mrf.mxu0
        %v642 = vadd.f32 0.0, %v641
        %643 = vdwg.mxu0
        %v644 = vadd.f32 %v549, %v635
        %v645 = vadd.f32 %v551, %v637
        %v646 = vadd.f32 %v554, %v640
        %v647 = vadd.f32 %v556, %v642
        %v648 = vld [vmem:[%s3] sm:$0x1]
        %v650 = vperm.slane %v648, 0
        %v652 = vadd.f32 %v644, %v650
        %v653 = vadd.f32 %v645, %v650
        %v654 = vadd.f32 %v646, %v650
        %v655 = vadd.f32 %v647, %v650
        %v656 = vmax.f32 %v652, 0.0
        %v657 = vmax.f32 %v653, 0.0
        %v658 = vmax.f32 %v654, 0.0
        %v659 = vmax.f32 %v655, 0.0
        %v660 = vrot.slane %v656, 7
        %v661 = vrot.slane %v657, 7
        %v662 = vrot.slane %v658, 7
        %v663 = vrot.slane %v659, 7
        %v664 = vsel %vm349, %v662, %v663
        %v665 = vsel %vm349, %v661, %v662
        %v666 = vsel %vm349, %v660, %v661
        %v667 = vsel %vm349, %v663, %v660
        %v668 = vsel %vm358, %v667, 0.0
        %v669 = vsel %vm359, %v666, 0.0
        %v670 = vsel %vm360, %v665, 0.0
        %v671 = vsel %vm361, %v664, 0.0
        %v672 = vrot.slane %v656, 1
        %v673 = vrot.slane %v657, 1
        %v674 = vrot.slane %v658, 1
        %v675 = vrot.slane %v659, 1
        %v676 = vsel %vm370, %v674, %v675
        %v677 = vsel %vm370, %v673, %v674
        %v678 = vsel %vm370, %v672, %v673
        %v679 = vsel %vm370, %v675, %v672
        %v680 = vsel %vm379, %v678, 0.0
        %v681 = vsel %vm380, %v677, 0.0
        %v682 = vsel %vm381, %v676, 0.0
        %v683 = vsel %vm382, %v679, 0.0
        %v684 = vpack.c.bf16 %v657, %v656
        %v685 = vpack.c.bf16 %v659, %v658
        %s686 = scalar_lea.vmem [#allocation7], 64
        %v687 = vld [vmem:[%s686] sm:$0xf]
        %v688 = vld [vmem:[%s686 + $0x4] sm:$0xf]
        %v689 = vld [vmem:[%s686 + $0x8] sm:$0xf]
        %v690 = vld [vmem:[%s686 + $0xc] sm:$0xf]
        %v691 = vld [vmem:[%s686 + $0x10] sm:$0xf]
        %v692 = vld [vmem:[%s686 + $0x14] sm:$0xf]
        %v693 = vld [vmem:[%s686 + $0x18] sm:$0xf]
        %v694 = vld [vmem:[%s686 + $0x1c] sm:$0xf]
        %v695 = vld [vmem:[%s686 + $0x20] sm:$0xf]
        %v696 = vld [vmem:[%s686 + $0x24] sm:$0xf]
        %v697 = vld [vmem:[%s686 + $0x28] sm:$0xf]
        %v698 = vld [vmem:[%s686 + $0x2c] sm:$0xf]
        %v699 = vld [vmem:[%s686 + $0x30] sm:$0xf]
        %v700 = vld [vmem:[%s686 + $0x34] sm:$0xf]
        %v701 = vld [vmem:[%s686 + $0x38] sm:$0xf]
        %v702 = vld [vmem:[%s686 + $0x3c] sm:$0xf]
        %v703 = vpack.c.bf16 %v669, %v668
        %v704 = vpack.c.bf16 %v671, %v670
        %v705 = vld [vmem:[#allocation7] sm:$0xf]
        %v706 = vld [vmem:[#allocation7 + $0x4] sm:$0xf]
        %v707 = vld [vmem:[#allocation7 + $0x8] sm:$0xf]
        %v708 = vld [vmem:[#allocation7 + $0xc] sm:$0xf]
        %v709 = vld [vmem:[#allocation7 + $0x10] sm:$0xf]
        %v710 = vld [vmem:[#allocation7 + $0x14] sm:$0xf]
        %v711 = vld [vmem:[#allocation7 + $0x18] sm:$0xf]
        %v712 = vld [vmem:[#allocation7 + $0x1c] sm:$0xf]
        %v713 = vld [vmem:[#allocation7 + $0x20] sm:$0xf]
        %v714 = vld [vmem:[#allocation7 + $0x24] sm:$0xf]
        %v715 = vld [vmem:[#allocation7 + $0x28] sm:$0xf]
        %v716 = vld [vmem:[#allocation7 + $0x2c] sm:$0xf]
        %v717 = vld [vmem:[#allocation7 + $0x30] sm:$0xf]
        %v718 = vld [vmem:[#allocation7 + $0x34] sm:$0xf]
        %v719 = vld [vmem:[#allocation7 + $0x38] sm:$0xf]
        %v720 = vld [vmem:[#allocation7 + $0x3c] sm:$0xf]
        %v737 = vunpack.c.l.b16 %v705
        %v738 = vunpack.c.l.b16 %v706
        %v739 = vunpack.c.l.b16 %v707
        %v740 = vunpack.c.l.b16 %v708
        %v741 = vunpack.c.l.b16 %v709
        %v742 = vunpack.c.l.b16 %v710
        %v743 = vunpack.c.l.b16 %v711
        %v744 = vunpack.c.l.b16 %v712
        %v745 = vunpack.c.l.b16 %v713
        %v746 = vunpack.c.l.b16 %v714
        %v747 = vunpack.c.l.b16 %v715
        %v748 = vunpack.c.l.b16 %v716
        %v749 = vunpack.c.l.b16 %v717
        %v750 = vunpack.c.l.b16 %v718
        %v751 = vunpack.c.l.b16 %v719
        %v752 = vunpack.c.l.b16 %v720
        %v753 = vpack.c.b16 %v738, %v737
        %v754 = vpack.c.b16 %v740, %v739
        %v755 = vpack.c.b16 %v742, %v741
        %v756 = vpack.c.b16 %v744, %v743
        %v757 = vpack.c.b16 %v746, %v745
        %v758 = vpack.c.b16 %v748, %v747
        %v759 = vpack.c.b16 %v750, %v749
        %v760 = vpack.c.b16 %v752, %v751
        %769 = vmatpush.bf16.msra.mxu0 %v760
        %770 = vmatpush.bf16.msra.mxu0 %v759
        %771 = vmatpush.bf16.msra.mxu0 %v758
        %772 = vmatpush.bf16.msra.mxu0 %v757
        %773 = vmatpush.bf16.msra.mxu0 %v756
        %774 = vmatpush.bf16.msra.mxu0 %v755
        %775 = vmatpush.bf16.msra.mxu0 %v754
        %776 = vmatpush.bf16.msra.mxu0 %v753
        %777 = vmatmul.bf16.gmra.mxu0 %v703
        %v778 = vpop.f32.mrf.mxu0
        %v779 = vadd.f32 0.0, %v778
        %v780 = vpop.f32.mrf.mxu0
        %v781 = vadd.f32 0.0, %v780
        %782 = vmatmul.bf16.gmra.mxu0 %v704
        %v783 = vpop.f32.mrf.mxu0
        %v784 = vadd.f32 0.0, %v783
        %v785 = vpop.f32.mrf.mxu0
        %v786 = vadd.f32 0.0, %v785
        %787 = vdwg.mxu0
        %v804 = vunpack.c.l.b16 %v687
        %v805 = vunpack.c.l.b16 %v688
        %v806 = vunpack.c.l.b16 %v689
        %v807 = vunpack.c.l.b16 %v690
        %v808 = vunpack.c.l.b16 %v691
        %v809 = vunpack.c.l.b16 %v692
        %v810 = vunpack.c.l.b16 %v693
        %v811 = vunpack.c.l.b16 %v694
        %v812 = vunpack.c.l.b16 %v695
        %v813 = vunpack.c.l.b16 %v696
        %v814 = vunpack.c.l.b16 %v697
        %v815 = vunpack.c.l.b16 %v698
        %v816 = vunpack.c.l.b16 %v699
        %v817 = vunpack.c.l.b16 %v700
        %v818 = vunpack.c.l.b16 %v701
        %v819 = vunpack.c.l.b16 %v702
        %v820 = vpack.c.b16 %v805, %v804
        %v821 = vpack.c.b16 %v807, %v806
        %v822 = vpack.c.b16 %v809, %v808
        %v823 = vpack.c.b16 %v811, %v810
        %v824 = vpack.c.b16 %v813, %v812
        %v825 = vpack.c.b16 %v815, %v814
        %v826 = vpack.c.b16 %v817, %v816
        %v827 = vpack.c.b16 %v819, %v818
        %836 = vmatpush.bf16.msra.mxu0 %v827
        %837 = vmatpush.bf16.msra.mxu0 %v826
        %838 = vmatpush.bf16.msra.mxu0 %v825
        %839 = vmatpush.bf16.msra.mxu0 %v824
        %840 = vmatpush.bf16.msra.mxu0 %v823
        %841 = vmatpush.bf16.msra.mxu0 %v822
        %842 = vmatpush.bf16.msra.mxu0 %v821
        %843 = vmatpush.bf16.msra.mxu0 %v820
        %844 = vmatmul.bf16.gmra.mxu0 %v684
        %v845 = vpop.f32.mrf.mxu0
        %v846 = vadd.f32 %v779, %v845
        %v847 = vpop.f32.mrf.mxu0
        %v848 = vadd.f32 %v781, %v847
        %849 = vmatmul.bf16.gmra.mxu0 %v685
        %v850 = vpop.f32.mrf.mxu0
        %v851 = vadd.f32 %v784, %v850
        %v852 = vpop.f32.mrf.mxu0
        %v853 = vadd.f32 %v786, %v852
        %854 = vdwg.mxu0
        %v855 = vpack.c.bf16 %v681, %v680
        %v856 = vpack.c.bf16 %v683, %v682
        %s857 = scalar_lea.vmem [#allocation7], 128
        %v858 = vld [vmem:[%s857] sm:$0xf]
        %v859 = vld [vmem:[%s857 + $0x4] sm:$0xf]
        %v860 = vld [vmem:[%s857 + $0x8] sm:$0xf]
        %v861 = vld [vmem:[%s857 + $0xc] sm:$0xf]
        %v862 = vld [vmem:[%s857 + $0x10] sm:$0xf]
        %v863 = vld [vmem:[%s857 + $0x14] sm:$0xf]
        %v864 = vld [vmem:[%s857 + $0x18] sm:$0xf]
        %v865 = vld [vmem:[%s857 + $0x1c] sm:$0xf]
        %v866 = vld [vmem:[%s857 + $0x20] sm:$0xf]
        %v867 = vld [vmem:[%s857 + $0x24] sm:$0xf]
        %v868 = vld [vmem:[%s857 + $0x28] sm:$0xf]
        %v869 = vld [vmem:[%s857 + $0x2c] sm:$0xf]
        %v870 = vld [vmem:[%s857 + $0x30] sm:$0xf]
        %v871 = vld [vmem:[%s857 + $0x34] sm:$0xf]
        %v872 = vld [vmem:[%s857 + $0x38] sm:$0xf]
        %v873 = vld [vmem:[%s857 + $0x3c] sm:$0xf]
        %v890 = vunpack.c.l.b16 %v858
        %v891 = vunpack.c.l.b16 %v859
        %v892 = vunpack.c.l.b16 %v860
        %v893 = vunpack.c.l.b16 %v861
        %v894 = vunpack.c.l.b16 %v862
        %v895 = vunpack.c.l.b16 %v863
        %v896 = vunpack.c.l.b16 %v864
        %v897 = vunpack.c.l.b16 %v865
        %v898 = vunpack.c.l.b16 %v866
        %v899 = vunpack.c.l.b16 %v867
        %v900 = vunpack.c.l.b16 %v868
        %v901 = vunpack.c.l.b16 %v869
        %v902 = vunpack.c.l.b16 %v870
        %v903 = vunpack.c.l.b16 %v871
        %v904 = vunpack.c.l.b16 %v872
        %v905 = vunpack.c.l.b16 %v873
        %v906 = vpack.c.b16 %v891, %v890
        %v907 = vpack.c.b16 %v893, %v892
        %v908 = vpack.c.b16 %v895, %v894
        %v909 = vpack.c.b16 %v897, %v896
        %v910 = vpack.c.b16 %v899, %v898
        %v911 = vpack.c.b16 %v901, %v900
        %v912 = vpack.c.b16 %v903, %v902
        %v913 = vpack.c.b16 %v905, %v904
        %922 = vmatpush.bf16.msra.mxu0 %v913
        %923 = vmatpush.bf16.msra.mxu0 %v912
        %924 = vmatpush.bf16.msra.mxu0 %v911
        %925 = vmatpush.bf16.msra.mxu0 %v910
        %926 = vmatpush.bf16.msra.mxu0 %v909
        %927 = vmatpush.bf16.msra.mxu0 %v908
        %928 = vmatpush.bf16.msra.mxu0 %v907
        %929 = vmatpush.bf16.msra.mxu0 %v906
        %930 = vmatmul.bf16.gmra.mxu0 %v855
        %v931 = vpop.f32.mrf.mxu0
        %v932 = vadd.f32 0.0, %v931
        %v933 = vpop.f32.mrf.mxu0
        %v934 = vadd.f32 0.0, %v933
        %935 = vmatmul.bf16.gmra.mxu0 %v856
        %v936 = vpop.f32.mrf.mxu0
        %v937 = vadd.f32 0.0, %v936
        %v938 = vpop.f32.mrf.mxu0
        %v939 = vadd.f32 0.0, %v938
        %940 = vdwg.mxu0
        %v941 = vadd.f32 %v846, %v932
        %v942 = vadd.f32 %v848, %v934
        %v943 = vadd.f32 %v851, %v937
        %v944 = vadd.f32 %v853, %v939
        %v945 = vld [vmem:[%s4] sm:$0x1]
        %v947 = vperm.slane %v945, 0
        %v949 = vadd.f32 %v941, %v947
        %v950 = vadd.f32 %v942, %v947
        %v951 = vadd.f32 %v943, %v947
        %v952 = vadd.f32 %v944, %v947
        %v953 = vadd.f32 %v949, %v280
        %v954 = vadd.f32 %v950, %v281
        %v955 = vadd.f32 %v951, %v282
        %v956 = vadd.f32 %v952, %v283
        %957 = vst [vmem:[%s277] sm:$0xff] %v953
        %958 = vst [vmem:[%s277 + $0x8] sm:$0xff] %v954
        %959 = vst [vmem:[%s277 + $0x10] sm:$0xff] %v955
        %960 = vst [vmem:[%s277 + $0x18] sm:$0xff] %v956
        %s961 = sand.u32 %s141, 1
        %s962 = scalar_lea.sflag [#allocation4], %s961
        %s963 = sand.u32 %s141, 1
        %s964 = smul.addr %s963, 32
        %s965 = scalar_lea.vmem [#allocation8], %s964
        // Predicated region
        $region53: #{tpu_custom_call.1} parent=39 // pred_check
          %p966 = pneg %p151
        $region54: #{tpu_custom_call.1} parent=39 // pred_check_branch
          %968 = sbr.rel (%p966) target = $region56
        $region55: #{tpu_custom_call.1} parent=39 // pred_region
          %s969 = smul.u32 4, %s23
          %971 = vsyncadd %s962, 0
          %s972 = smul.addr %s969, 8
          %s973 = scalar_lea.hbm %s5, %s972
          %s974 = sshll.u32 %s965, 4
          %s975 = int_to_ptr.vmem [resolvable:$true] %s974
          %s976 = sshll.u32 %s973, 4
          %s977 = int_to_ptr.hbm [resolvable:$true] %s976
          %982 = dma.vmem_to_hbm [thread:$0]  %s975, 512, %s977, %s962, 128, 128, 8
        $region56: #{tpu_custom_call.1} parent=39 // pred_fallthru
          _
      $region40: #{tpu_custom_call.1} parent=5 // pred_fallthru
        _
      %p983 = scmp.le.s32.totalorder 2, %s18
      // Predicated region
      $region57: #{tpu_custom_call.1} parent=5 // pred_check
        %p984 = pneg %p983
      $region58: #{tpu_custom_call.1} parent=5 // pred_check_branch
        %986 = sbr.rel (%p984) target = $region60
      $region59: #{tpu_custom_call.1} parent=5 // pred_region
        %s987 = ssub.s32 %s18, 2
        // Predicated region
        $region61: #{tpu_custom_call.1} parent=59 // pred_check
          %p988 = pneg %p157
        $region62: #{tpu_custom_call.1} parent=59 // pred_check_branch
          %990 = sbr.rel (%p988) target = $region64
        $region63: #{tpu_custom_call.1} parent=59 // pred_region
          %s991 = sand.u32 %s142, 1
          %s992 = scalar_lea.sflag [#allocation4], %s991
          %s993 = sand.u32 %s142, 1
          %s994 = smul.addr %s993, 32
          %s995 = scalar_lea.vmem [#allocation8], %s994
          %997 = dma.done %s992, 512
        $region64: #{tpu_custom_call.1} parent=59 // pred_fallthru
          _
      $region60: #{tpu_custom_call.1} parent=5 // pred_fallthru
        _
    $region6: #{tpu_custom_call.1} parent=1 // loop_footer
      %s22 = sadd.s32 1, %s18
    $region7: #{tpu_custom_call.1} parent=1 // loop_footer_branch
      %17 = sbr.rel target = $region3
    $region8: #{tpu_custom_call.1} parent=1 // loop_exit
      _
    %998 = vsyncpa [#allocation3], 1
    %s999 = scalar_lea.sflag [#allocation3], 1
    %1000 = vsyncpa %s999, 1
    %1001 = vsyncpa [#allocation6], 1
    %1002 = vsyncpa [#allocation4], 1
    %s1003 = scalar_lea.sflag [#allocation4], 1
    %1004 = vsyncpa %s1003, 1

</llo_original>
